<compile_context>
chip_gen: v6e
topology: v6e:2x2x1
jax: 0.10.0
libtpu: 0.0.40
codegen_flags: <defaults>
</compile_context>

<pallas_src>
import functools

import numpy as np
import jax
import jax.numpy as jnp
from jax.experimental import pallas as pl
from jax.experimental.pallas import tpu as pltpu


# -----------------------------------------------------------------------------
# Kernel 1: 3 independent LSTM encoders -> final (h, c) per encoder
# -----------------------------------------------------------------------------
def _multi_lstm_kernel(lens_ref,              # SMEM (3,) int32  (scalar prefetch)
                       x_ref,                 # (1, T_max*B, I)   time-major, flattened
                       wih_ref,               # (1, I, 4H)        W_ih^T
                       whh_ref,               # (1, H, 4H)        W_hh^T
                       bias_ref,              # (1, 1, 4H)        b_ih + b_hh
                       h_out_ref,             # (1, B, H)
                       c_out_ref,             # (1, B, H)
                       xw_scr,                # VMEM (T_max*B, 4H) f32 scratch
                       *, B, H):
    e = pl.program_id(0)
    t_len = lens_ref[e]                       # dynamic #timesteps for this encoder

    # --- Phase 1 (hoisted out of the recurrence): one dense MXU matmul for all
    #     timesteps, bias folded in once.  Padded timesteps compute on zeros.
    xw_scr[...] = (
        jnp.dot(x_ref[0], wih_ref[0], preferred_element_type=jnp.float32)
        + bias_ref[0]
    )

    whh = whh_ref[0]                          # (H, 4H), loop-invariant

    # --- Phase 2: serial recurrence, h/c carried in vregs.
    def step(t, carry):
        h, c = carry
        xw_t = xw_scr[pl.ds(t * B, B), :]     # (B, 4H) precomputed gates (input part)
        gates = xw_t + jnp.dot(h, whh, preferred_element_type=jnp.float32)
        i_g = jax.nn.sigmoid(gates[:, 0 * H:1 * H])
        f_g = jax.nn.sigmoid(gates[:, 1 * H:2 * H])
        g_g = jnp.tanh(gates[:, 2 * H:3 * H])
        o_g = jax.nn.sigmoid(gates[:, 3 * H:4 * H])
        c_new = f_g * c + i_g * g_g
        h_new = o_g * jnp.tanh(c_new)
        return (h_new, c_new)

    h0 = jnp.zeros((B, H), jnp.float32)
    c0 = jnp.zeros((B, H), jnp.float32)
    h_fin, c_fin = jax.lax.fori_loop(0, t_len, step, (h0, c0))

    h_out_ref[0] = h_fin
    c_out_ref[0] = c_fin


# -----------------------------------------------------------------------------
# Kernel 2: FusionLayer_Enc for hidden and cell states
#   f = fc3( fc2( fc1(in1) + in2 ) + in3 )
# -----------------------------------------------------------------------------
def _fusion_kernel(h_ref, c_ref,              # (3, B, H) each
                   wh_ref, bh_ref,            # (3, H, H), (3, 1, H)  (weights pre-T)
                   wc_ref, bc_ref,            # (3, H, H), (3, 1, H)
                   fh_ref, fc_ref):           # (B, H) outputs
    def chain(s_ref, w_ref, b_ref):
        f = jnp.dot(s_ref[0], w_ref[0], preferred_element_type=jnp.float32) + b_ref[0]
        f = f + s_ref[1]
        f = jnp.dot(f, w_ref[1], preferred_element_type=jnp.float32) + b_ref[1]
        f = f + s_ref[2]
        f = jnp.dot(f, w_ref[2], preferred_element_type=jnp.float32) + b_ref[2]
        return f

    fh_ref[...] = chain(h_ref, wh_ref, bh_ref)
    fc_ref[...] = chain(c_ref, wc_ref, bc_ref)


# -----------------------------------------------------------------------------
# Wrapper
# -----------------------------------------------------------------------------
def multi_encoder_pallas(x, params, window_size, decay_ratio):
    """x: (B, window_size, I). Returns (fusion_h, fusion_c), each (1, B, H)."""
    B, T, I = x.shape
    H = params["enc"][0]["weight_hh"].shape[1]
    assert T == window_size

    w1 = int(window_size * decay_ratio ** 2)
    w2 = int(window_size * decay_ratio)
    idx1 = np.linspace(0, window_size - 1, w1, dtype=int)
    idx2 = np.linspace(0, window_size - 1, w2, dtype=int)
    idx3 = np.arange(window_size)
    t_max = window_size
    lens = jnp.array([w1, w2, window_size], jnp.int32)

    def prep_x(idx):
        xe = x[:, idx, :]                           # (B, T_e, I) static gather
        xe = jnp.transpose(xe, (1, 0, 2))           # (T_e, B, I) time-major
        xe = jnp.pad(xe, ((0, t_max - xe.shape[0]), (0, 0), (0, 0)))
        return xe.reshape(t_max * B, I)             # rows ordered (t, b)

    x_stack = jnp.stack([prep_x(idx1), prep_x(idx2), prep_x(idx3)], axis=0)

    wih_stack = jnp.stack([p["weight_ih"].T for p in params["enc"]], axis=0)   # (3,I,4H)
    whh_stack = jnp.stack([p["weight_hh"].T for p in params["enc"]], axis=0)   # (3,H,4H)
    bias_stack = jnp.stack(
        [(p["bias_ih"] + p["bias_hh"]).reshape(1, 4 * H) for p in params["enc"]],
        axis=0)                                                                 # (3,1,4H)

    lstm_kernel = functools.partial(_multi_lstm_kernel, B=B, H=H)

    h_stack, c_stack = pl.pallas_call(
        lstm_kernel,
        out_shape=(jax.ShapeDtypeStruct((3, B, H), jnp.float32),
                   jax.ShapeDtypeStruct((3, B, H), jnp.float32)),
        grid_spec=pltpu.PrefetchScalarGridSpec(
            num_scalar_prefetch=1,
            grid=(3,),
            in_specs=[
                pl.BlockSpec((1, t_max * B, I), lambda e, lens: (e, 0, 0)),  # x (flat)
                pl.BlockSpec((1, I, 4 * H), lambda e, lens: (e, 0, 0)),      # W_ih^T
                pl.BlockSpec((1, H, 4 * H), lambda e, lens: (e, 0, 0)),      # W_hh^T
                pl.BlockSpec((1, 1, 4 * H), lambda e, lens: (e, 0, 0)),      # bias
            ],
            out_specs=[
                pl.BlockSpec((1, B, H), lambda e, lens: (e, 0, 0)),          # h_T
                pl.BlockSpec((1, B, H), lambda e, lens: (e, 0, 0)),          # c_T
            ],
            scratch_shapes=[pltpu.VMEM((t_max * B, 4 * H), jnp.float32)],
        ),
        compiler_params=pltpu.CompilerParams(
            dimension_semantics=("parallel",),       # 3 encoders independent (megacore)
            vmem_limit_bytes=32 * 1024 * 1024,
        ),
    )(lens, x_stack, wih_stack, whh_stack, bias_stack)

    wh_stack = jnp.stack([l["weight"].T for l in params["hidden_fusion"]], axis=0)
    bh_stack = jnp.stack([l["bias"].reshape(1, H) for l in params["hidden_fusion"]], axis=0)
    wc_stack = jnp.stack([l["weight"].T for l in params["cell_fusion"]], axis=0)
    bc_stack = jnp.stack([l["bias"].reshape(1, H) for l in params["cell_fusion"]], axis=0)

    fusion_h, fusion_c = pl.pallas_call(
        _fusion_kernel,
        out_shape=(jax.ShapeDtypeStruct((B, H), jnp.float32),
                   jax.ShapeDtypeStruct((B, H), jnp.float32)),
    )(h_stack, c_stack, wh_stack, bh_stack, wc_stack, bc_stack)

    # PyTorch nn.LSTM returns hidden states with a leading num_layers=1 axis.
    return fusion_h[None], fusion_c[None]


# -----------------------------------------------------------------------------
# Pure-JAX reference (replicates the PyTorch module)
# -----------------------------------------------------------------------------
def multi_encoder_ref(x, params, window_size, decay_ratio):
    B, T, I = x.shape
    H = params["enc"][0]["weight_hh"].shape[1]
    w1 = int(window_size * decay_ratio ** 2)
    w2 = int(window_size * decay_ratio)
    idx1 = np.linspace(0, window_size - 1, w1, dtype=int)
    idx2 = np.linspace(0, window_size - 1, w2, dtype=int)
    hp = jax.lax.Precision.HIGHEST

    def lstm_final(xe, p):
        h = jnp.zeros((B, H), jnp.float32)
        c = jnp.zeros((B, H), jnp.float32)
        for t in range(xe.shape[1]):
            g = (jnp.dot(xe[:, t, :], p["weight_ih"].T, precision=hp) + p["bias_ih"]
                 + jnp.dot(h, p["weight_hh"].T, precision=hp) + p["bias_hh"])
            i_g = jax.nn.sigmoid(g[:, 0 * H:1 * H])
            f_g = jax.nn.sigmoid(g[:, 1 * H:2 * H])
            g_g = jnp.tanh(g[:, 2 * H:3 * H])
            o_g = jax.nn.sigmoid(g[:, 3 * H:4 * H])
            c = f_g * c + i_g * g_g
            h = o_g * jnp.tanh(c)
        return h, c

    h1, c1 = lstm_final(x[:, idx1, :], params["enc"][0])
    h2, c2 = lstm_final(x[:, idx2, :], params["enc"][1])
    h3, c3 = lstm_final(x, params["enc"][2])

    def fuse(a, b, cc, layers):
        f = jnp.dot(a, layers[0]["weight"].T, precision=hp) + layers[0]["bias"]
        f = f + b
        f = jnp.dot(f, layers[1]["weight"].T, precision=hp) + layers[1]["bias"]
        f = f + cc
        f = jnp.dot(f, layers[2]["weight"].T, precision=hp) + layers[2]["bias"]
        return f

    fh = fuse(h1, h2, h3, params["hidden_fusion"])
    fc = fuse(c1, c2, c3, params["cell_fusion"])
    return fh[None], fc[None]


def init_params(key, input_size, hidden_size):
    H = hidden_size
    keys = iter(jax.random.split(key, 24))
    s = 1.0 / float(np.sqrt(H))

    enc = []
    for _ in range(3):
        enc.append({
            "weight_ih": jax.random.uniform(next(keys), (4 * H, input_size), jnp.float32, -s, s),
            "weight_hh": jax.random.uniform(next(keys), (4 * H, H), jnp.float32, -s, s),
            "bias_ih": jax.random.uniform(next(keys), (4 * H,), jnp.float32, -s, s),
            "bias_hh": jax.random.uniform(next(keys), (4 * H,), jnp.float32, -s, s),
        })

    def fusion_layers():
        return [{
            "weight": jax.random.uniform(next(keys), (H, H), jnp.float32, -s, s),
            "bias": jax.random.uniform(next(keys), (H,), jnp.float32, -s, s),
        } for _ in range(3)]

    return {"enc": enc, "hidden_fusion": fusion_layers(), "cell_fusion": fusion_layers()}


if __name__ == "__main__":
    B, I, H = 2, 8, 32
    window_size, decay_ratio = 16, 0.5

    key = jax.random.PRNGKey(0)
    k_x, k_p = jax.random.split(key)
    x = jax.random.normal(k_x, (B, window_size, I), jnp.float32)
    params = init_params(k_p, I, H)

    fh, fc = multi_encoder_pallas(x, params, window_size, decay_ratio)
    (fh, fc) = jax.block_until_ready((fh, fc))

    rfh, rfc = multi_encoder_ref(x, params, window_size, decay_ratio)

    assert fh.shape == (1, B, H) and fc.shape == (1, B, H)
    assert jnp.allclose(fh, rfh, atol=1e-4, rtol=1e-4), "fusion_h mismatch vs reference"
    assert jnp.allclose(fc, rfc, atol=1e-4, rtol=1e-4), "fusion_c mismatch vs reference"

    print("KERNEL_OK")
</pallas_src>

<mosaic_0001>
module attributes {stable_mosaic.version = 11 : i64} {
  func.func @_multi_lstm_kernel(%arg0: i32, %arg1: memref<3xi32, #tpu.memory_space<smem>>, %arg2: memref<1x32x8xf32, #tpu.memory_space<vmem>>, %arg3: memref<1x8x128xf32, #tpu.memory_space<vmem>>, %arg4: memref<1x32x128xf32, #tpu.memory_space<vmem>>, %arg5: memref<1x1x128xf32, #tpu.memory_space<vmem>>, %arg6: memref<1x2x32xf32, #tpu.memory_space<vmem>>, %arg7: memref<1x2x32xf32, #tpu.memory_space<vmem>>, %arg8: memref<32x128xf32, #tpu.memory_space<vmem>>) attributes {dimension_semantics = [#tpu.dimension_semantics<parallel>], iteration_bounds = array<i64: 3>, scalar_prefetch = 1 : i64, scratch_operands = 1 : i64, tpu.core_type = #tpu.core_type<tc>, window_params = [{transform_indices = @transform_0, window_bounds = array<i64: 1, 32, 8>}, {transform_indices = @transform_1, window_bounds = array<i64: 1, 8, 128>}, {transform_indices = @transform_2, window_bounds = array<i64: 1, 32, 128>}, {transform_indices = @transform_3, window_bounds = array<i64: 1, 1, 128>}, {transform_indices = @transform_4, window_bounds = array<i64: 1, 2, 32>}, {transform_indices = @transform_5, window_bounds = array<i64: 1, 2, 32>}]} {
    %0 = arith.index_cast %arg0 : i32 to index
    %1 = memref.load %arg1[%0] : memref<3xi32, #tpu.memory_space<smem>>
    %c0 = arith.constant 0 : index
    %c0_0 = arith.constant 0 : index
    %c0_1 = arith.constant 0 : index
    %2 = vector.load %arg2[%c0, %c0_0, %c0_1] : memref<1x32x8xf32, #tpu.memory_space<vmem>>, vector<1x32x8xf32>
    %3 = vector.shape_cast %2 : vector<1x32x8xf32> to vector<32x8xf32>
    %c0_2 = arith.constant 0 : index
    %c0_3 = arith.constant 0 : index
    %c0_4 = arith.constant 0 : index
    %4 = vector.load %arg3[%c0_2, %c0_3, %c0_4] : memref<1x8x128xf32, #tpu.memory_space<vmem>>, vector<1x8x128xf32>
    %5 = vector.shape_cast %4 : vector<1x8x128xf32> to vector<8x128xf32>
    %cst = arith.constant dense<0.000000e+00> : vector<32x128xf32>
    %6 = tpu.matmul %3, %5, %cst {dimension_numbers = #tpu.dot_dimension_numbers<[1], [0], [0], [1], [0, 0, 1, 1], [], []>} : vector<32x8xf32>, vector<8x128xf32>, vector<32x128xf32> -> vector<32x128xf32>
    %c0_5 = arith.constant 0 : index
    %c0_6 = arith.constant 0 : index
    %c0_7 = arith.constant 0 : index
    %7 = vector.load %arg5[%c0_5, %c0_6, %c0_7] : memref<1x1x128xf32, #tpu.memory_space<vmem>>, vector<1x1x128xf32>
    %8 = vector.shape_cast %7 : vector<1x1x128xf32> to vector<1x128xf32>
    %9 = vector.broadcast %8 : vector<1x128xf32> to vector<32x128xf32>
    %10 = arith.addf %6, %9 : vector<32x128xf32>
    %c0_8 = arith.constant 0 : index
    %c0_9 = arith.constant 0 : index
    %11 = vector.load %arg8[%c0_8, %c0_9] : memref<32x128xf32, #tpu.memory_space<vmem>>, vector<32x128xf32>
    tpu.vector_store %arg8[%c0_8, %c0_9], %10 {strides = array<i32>} : memref<32x128xf32, #tpu.memory_space<vmem>>, vector<32x128xf32>,
    %c0_10 = arith.constant 0 : index
    %c0_11 = arith.constant 0 : index
    %c0_12 = arith.constant 0 : index
    %12 = vector.load %arg4[%c0_10, %c0_11, %c0_12] : memref<1x32x128xf32, #tpu.memory_space<vmem>>, vector<1x32x128xf32>
    %13 = vector.shape_cast %12 : vector<1x32x128xf32> to vector<32x128xf32>
    %cst_13 = arith.constant 0.000000e+00 : f32
    %14 = vector.broadcast %cst_13 : f32 to vector<2x32xf32>
    %cst_14 = arith.constant 0.000000e+00 : f32
    %15 = vector.broadcast %cst_14 : f32 to vector<2x32xf32>
    %c0_i32 = arith.constant 0 : i32
    %16 = arith.subi %1, %c0_i32 : i32
    %17 = arith.addi %c0_i32, %16 : i32
    %c1_i32 = arith.constant 1 : i32
    %18:2 = scf.for %arg9 = %c0_i32 to %17 step %c1_i32 iter_args(%arg10 = %14, %arg11 = %15) -> (vector<2x32xf32>, vector<2x32xf32>)  : i32 {
      %c2_i32 = arith.constant 2 : i32
      %25 = arith.muli %arg9, %c2_i32 : i32
      %26 = arith.index_cast %25 : i32 to index
      %c0_21 = arith.constant 0 : index
      %27 = vector.load %arg8[%26, %c0_21] : memref<32x128xf32, #tpu.memory_space<vmem>>, vector<2x128xf32>
      %cst_22 = arith.constant dense<0.000000e+00> : vector<2x128xf32>
      %28 = tpu.matmul %arg10, %13, %cst_22 {dimension_numbers = #tpu.dot_dimension_numbers<[1], [0], [0], [1], [0, 0, 1, 1], [], []>} : vector<2x32xf32>, vector<32x128xf32>, vector<2x128xf32> -> vector<2x128xf32>
      %29 = arith.addf %27, %28 : vector<2x128xf32>
      %30 = vector.extract_strided_slice %29 {offsets = [0, 0], sizes = [2, 32], strides = [1, 1]} : vector<2x128xf32> to vector<2x32xf32>
      %31 = arith.negf %30 : vector<2x32xf32>
      %32 = math.exp %31 : vector<2x32xf32>
      %cst_23 = arith.constant 1.000000e+00 : f32
      %33 = vector.broadcast %cst_23 : f32 to vector<2x32xf32>
      %34 = arith.addf %33, %32 : vector<2x32xf32>
      %35 = arith.divf %33, %34 : vector<2x32xf32>
      %36 = vector.extract_strided_slice %29 {offsets = [0, 32], sizes = [2, 32], strides = [1, 1]} : vector<2x128xf32> to vector<2x32xf32>
      %37 = arith.negf %36 : vector<2x32xf32>
      %38 = math.exp %37 : vector<2x32xf32>
      %cst_24 = arith.constant 1.000000e+00 : f32
      %39 = vector.broadcast %cst_24 : f32 to vector<2x32xf32>
      %40 = arith.addf %39, %38 : vector<2x32xf32>
      %41 = arith.divf %39, %40 : vector<2x32xf32>
      %42 = vector.extract_strided_slice %29 {offsets = [0, 64], sizes = [2, 32], strides = [1, 1]} : vector<2x128xf32> to vector<2x32xf32>
      %43 = math.tanh %42 : vector<2x32xf32>
      %44 = vector.extract_strided_slice %29 {offsets = [0, 96], sizes = [2, 32], strides = [1, 1]} : vector<2x128xf32> to vector<2x32xf32>
      %45 = arith.negf %44 : vector<2x32xf32>
      %46 = math.exp %45 : vector<2x32xf32>
      %cst_25 = arith.constant 1.000000e+00 : f32
      %47 = vector.broadcast %cst_25 : f32 to vector<2x32xf32>
      %48 = arith.addf %47, %46 : vector<2x32xf32>
      %49 = arith.divf %47, %48 : vector<2x32xf32>
      %50 = arith.mulf %41, %arg11 : vector<2x32xf32>
      %51 = arith.mulf %35, %43 : vector<2x32xf32>
      %52 = arith.addf %50, %51 : vector<2x32xf32>
      %53 = math.tanh %52 : vector<2x32xf32>
      %54 = arith.mulf %49, %53 : vector<2x32xf32>
      scf.yield %54, %52 : vector<2x32xf32>, vector<2x32xf32>
    }
    %c0_15 = arith.constant 0 : index
    %c0_16 = arith.constant 0 : index
    %c0_17 = arith.constant 0 : index
    %19 = vector.load %arg6[%c0_15, %c0_16, %c0_17] : memref<1x2x32xf32, #tpu.memory_space<vmem>>, vector<1x2x32xf32>
    %20 = vector.shape_cast %19 : vector<1x2x32xf32> to vector<2x32xf32>
    %21 = vector.shape_cast %18#0 : vector<2x32xf32> to vector<1x2x32xf32>
    tpu.vector_store %arg6[%c0_15, %c0_16, %c0_17], %21 {strides = array<i32>} : memref<1x2x32xf32, #tpu.memory_space<vmem>>, vector<1x2x32xf32>,
    %c0_18 = arith.constant 0 : index
    %c0_19 = arith.constant 0 : index
    %c0_20 = arith.constant 0 : index
    %22 = vector.load %arg7[%c0_18, %c0_19, %c0_20] : memref<1x2x32xf32, #tpu.memory_space<vmem>>, vector<1x2x32xf32>
    %23 = vector.shape_cast %22 : vector<1x2x32xf32> to vector<2x32xf32>
    %24 = vector.shape_cast %18#1 : vector<2x32xf32> to vector<1x2x32xf32>
    tpu.vector_store %arg7[%c0_18, %c0_19, %c0_20], %24 {strides = array<i32>} : memref<1x2x32xf32, #tpu.memory_space<vmem>>, vector<1x2x32xf32>,
    return
  }
  func.func @transform_0(%arg0: i32, %arg1: memref<3xi32, #tpu.memory_space<smem>>) -> (i32, i32, i32) {
    %c0_i32 = arith.constant 0 : i32
    %c0_i32_0 = arith.constant 0 : i32
    %c0_i32_1 = arith.constant 0 : i32
    return %arg0, %c0_i32, %c0_i32_0 : i32, i32, i32
  }
  func.func @transform_1(%arg0: i32, %arg1: memref<3xi32, #tpu.memory_space<smem>>) -> (i32, i32, i32) {
    %c0_i32 = arith.constant 0 : i32
    %c0_i32_0 = arith.constant 0 : i32
    %c0_i32_1 = arith.constant 0 : i32
    return %arg0, %c0_i32, %c0_i32_0 : i32, i32, i32
  }
  func.func @transform_2(%arg0: i32, %arg1: memref<3xi32, #tpu.memory_space<smem>>) -> (i32, i32, i32) {
    %c0_i32 = arith.constant 0 : i32
    %c0_i32_0 = arith.constant 0 : i32
    %c0_i32_1 = arith.constant 0 : i32
    return %arg0, %c0_i32, %c0_i32_0 : i32, i32, i32
  }
  func.func @transform_3(%arg0: i32, %arg1: memref<3xi32, #tpu.memory_space<smem>>) -> (i32, i32, i32) {
    %c0_i32 = arith.constant 0 : i32
    %c0_i32_0 = arith.constant 0 : i32
    %c0_i32_1 = arith.constant 0 : i32
    return %arg0, %c0_i32, %c0_i32_0 : i32, i32, i32
  }
  func.func @transform_4(%arg0: i32, %arg1: memref<3xi32, #tpu.memory_space<smem>>) -> (i32, i32, i32) {
    %c0_i32 = arith.constant 0 : i32
    %c0_i32_0 = arith.constant 0 : i32
    %c0_i32_1 = arith.constant 0 : i32
    return %arg0, %c0_i32, %c0_i32_0 : i32, i32, i32
  }
  func.func @transform_5(%arg0: i32, %arg1: memref<3xi32, #tpu.memory_space<smem>>) -> (i32, i32, i32) {
    %c0_i32 = arith.constant 0 : i32
    %c0_i32_0 = arith.constant 0 : i32
    %c0_i32_1 = arith.constant 0 : i32
    return %arg0, %c0_i32, %c0_i32_0 : i32, i32, i32
  }
}

</mosaic_0001>

<llo_original>
// kernel: tpu_custom_call.1
$region0: #{tpu_custom_call.1}
  #allocation0 [shape = 'u32[]', space=smem, size = 0x4, offset = 0x4, fixed_abs, tag = 'smem constant byte address 0x4 - core index']
  #allocation1 [shape = 'u32[144,128]{1,0:T(1,128)}', space=vmem, size = 0x12000, scoped, tag = 'internal scratch']
  #allocation2 [shape = 'f32[32,128]{1,0:T(8,128)}', space=vmem, size = 0x4000, scoped, tag = 'scratch operand']
  #allocation3 [shape = 's32[1]{0}', space=sflag, size = 0x4, scoped, tag = 'scoped memory for tpu_custom_call.1']
  #allocation4 [shape = 'u8[512]{0}', space=smem, size = 0x200, scoped, tag = 'prefetched SMEM operand 0']
  %s0 = inlined_call_operand.vmem [shape: s32[3], index: 0, kind: input, shape index: {}]
  %s1 = inlined_call_operand.vmem [shape: f32[3,32,8], index: 1, kind: input, shape index: {}]
  %s2 = inlined_call_operand.vmem [shape: f32[3,8,128], index: 2, kind: input, shape index: {}]
  %s3 = inlined_call_operand.vmem [shape: f32[3,32,128], index: 3, kind: input, shape index: {}]
  %s4 = inlined_call_operand.vmem [shape: f32[3,1,128], index: 4, kind: input, shape index: {}]
  %s5 = inlined_call_operand.hbm [shape: f32[3,2,32], index: 5, kind: output, shape index: {0}]
  %s6 = inlined_call_operand.hbm [shape: f32[3,2,32], index: 6, kind: output, shape index: {1}]
  %7 = xla_tuple %s5, %s6
  %s8 = sld [smem:[#allocation0]]
  $region64: #{tpu_custom_call.1} parent=0
    _
  %s10 = ssub.s32 1, %s8
  %s11 = scalar_select 0, %s10, %s8
  %s12 = sshll.u32 %s0, 4
  %s13 = int_to_ptr.vmem [resolvable:$true] %s12
  %15 = dma.vmem_to_smem %s13, 16, [#allocation4], [#allocation3]
  %16 = dma.done [#allocation3], 16
  %17 = sfence
  $region1: #{tpu_custom_call.1} parent=0
    #allocation5 [shape = 'u8[2048]{0}', space=vmem, size = 0x800, scoped, tag = 'output window, operand 0']
    #allocation6 [shape = 's32[2]{0}', space=sflag, size = 0x8, scoped, tag = 'scoped memory for tpu_custom_call.1']
    #allocation7 [shape = 'u8[2048]{0}', space=vmem, size = 0x800, scoped, tag = 'output window, operand 1']
    #allocation8 [shape = 's32[2]{0}', space=sflag, size = 0x8, scoped, tag = 'scoped memory for tpu_custom_call.1']
    %18 = vsyncpa [#allocation6], 0
    %s19 = scalar_lea.sflag [#allocation6], 1
    %20 = vsyncpa %s19, 0
    %21 = vsyncpa [#allocation8], 0
    %s22 = scalar_lea.sflag [#allocation8], 1
    %23 = vsyncpa %s22, 0
    loop: start=0, step=1, limit=5
    $region2: #{tpu_custom_call.1} parent=1 // loop_pre_header
      _
    $region3: #{tpu_custom_call.1} parent=1 // loop_header
      %s25 = sphi 0, %s29
      %p26 = scmp.ge.s32.totalorder %s25, 5
      %s35 = sphi 0, %s37
      %s38 = sphi 0, %s35
      %s39 = sphi 0, %s38
      %s55 = sphi 0, %s39
      %s61 = sphi 0, %s63
      %s64 = sphi 0, %s61
      %s65 = sphi 0, %s64
      %s81 = sphi 0, %s65
      %s87 = sphi 0, %s89
      %s90 = sphi 0, %s87
      %s91 = sphi 0, %s90
      %s107 = sphi 0, %s91
      %s113 = sphi 0, %s115
      %s116 = sphi 0, %s113
      %s117 = sphi 0, %s116
      %s133 = sphi 0, %s117
      %s139 = sphi 0, %s141
      %s142 = sphi 0, %s139
      %s143 = sphi 0, %s142
      %s159 = sphi 0, %s143
      %s165 = sphi 0, %s167
      %s168 = sphi 0, %s165
      %s169 = sphi 0, %s168
      %s185 = sphi 0, %s169
    $region4: #{tpu_custom_call.1} parent=1 // loop_header_branch
      %28 = sbr.rel (%p26) target = $region8
    $region5: #{tpu_custom_call.1} parent=1 // loop_body
      %s30 = ssub.s32 %s25, 1
      %s31 = ssub.s32 %s25, 2
      %s32 = sadd.s32 %s25, 1
      %s33 = ssub.s32 %s25, %s32
      %p34 = scmp.eq.s32.totalorder %s33, 0
      %s36 = sadd.s32 %s35, 1
      %s37 = scalar_select %p34, %s35, %s36
      %p40 = pneg %p34
      %p41 = scmp.eq.s32.totalorder %s25, 2
      %p42 = por %p40, %p41
      %p43 = scmp.ne.s32.totalorder %s35, %s38
      %p44 = scmp.eq.s32.totalorder %s25, 0
      %p45 = por %p43, %p44
      %p46 = scmp.ne.s32.totalorder %s35, %s38
      %p47 = scmp.eq.s32.totalorder %s30, 2
      %p48 = por %p46, %p47
      %p49 = scmp.ne.s32.totalorder %s38, %s39
      %p50 = scmp.eq.s32.totalorder %s30, 0
      %p51 = por %p49, %p50
      %p52 = scmp.ne.s32.totalorder %s38, %s39
      %p53 = scmp.eq.s32.totalorder %s31, 2
      %p54 = por %p52, %p53
      %p56 = scmp.ne.s32.totalorder %s39, %s55
      %p57 = scmp.eq.s32.totalorder %s31, 0
      %p58 = por %p56, %p57
      %s59 = ssub.s32 %s25, %s32
      %p60 = scmp.eq.s32.totalorder %s59, 0
      %s62 = sadd.s32 %s61, 1
      %s63 = scalar_select %p60, %s61, %s62
      %p66 = pneg %p60
      %p67 = scmp.eq.s32.totalorder %s25, 2
      %p68 = por %p66, %p67
      %p69 = scmp.ne.s32.totalorder %s61, %s64
      %p70 = scmp.eq.s32.totalorder %s25, 0
      %p71 = por %p69, %p70
      %p72 = scmp.ne.s32.totalorder %s61, %s64
      %p73 = scmp.eq.s32.totalorder %s30, 2
      %p74 = por %p72, %p73
      %p75 = scmp.ne.s32.totalorder %s64, %s65
      %p76 = scmp.eq.s32.totalorder %s30, 0
      %p77 = por %p75, %p76
      %p78 = scmp.ne.s32.totalorder %s64, %s65
      %p79 = scmp.eq.s32.totalorder %s31, 2
      %p80 = por %p78, %p79
      %p82 = scmp.ne.s32.totalorder %s65, %s81
      %p83 = scmp.eq.s32.totalorder %s31, 0
      %p84 = por %p82, %p83
      %s85 = ssub.s32 %s25, %s32
      %p86 = scmp.eq.s32.totalorder %s85, 0
      %s88 = sadd.s32 %s87, 1
      %s89 = scalar_select %p86, %s87, %s88
      %p92 = pneg %p86
      %p93 = scmp.eq.s32.totalorder %s25, 2
      %p94 = por %p92, %p93
      %p95 = scmp.ne.s32.totalorder %s87, %s90
      %p96 = scmp.eq.s32.totalorder %s25, 0
      %p97 = por %p95, %p96
      %p98 = scmp.ne.s32.totalorder %s87, %s90
      %p99 = scmp.eq.s32.totalorder %s30, 2
      %p100 = por %p98, %p99
      %p101 = scmp.ne.s32.totalorder %s90, %s91
      %p102 = scmp.eq.s32.totalorder %s30, 0
      %p103 = por %p101, %p102
      %p104 = scmp.ne.s32.totalorder %s90, %s91
      %p105 = scmp.eq.s32.totalorder %s31, 2
      %p106 = por %p104, %p105
      %p108 = scmp.ne.s32.totalorder %s91, %s107
      %p109 = scmp.eq.s32.totalorder %s31, 0
      %p110 = por %p108, %p109
      %s111 = ssub.s32 %s25, %s32
      %p112 = scmp.eq.s32.totalorder %s111, 0
      %s114 = sadd.s32 %s113, 1
      %s115 = scalar_select %p112, %s113, %s114
      %p118 = pneg %p112
      %p119 = scmp.eq.s32.totalorder %s25, 2
      %p120 = por %p118, %p119
      %p121 = scmp.ne.s32.totalorder %s113, %s116
      %p122 = scmp.eq.s32.totalorder %s25, 0
      %p123 = por %p121, %p122
      %p124 = scmp.ne.s32.totalorder %s113, %s116
      %p125 = scmp.eq.s32.totalorder %s30, 2
      %p126 = por %p124, %p125
      %p127 = scmp.ne.s32.totalorder %s116, %s117
      %p128 = scmp.eq.s32.totalorder %s30, 0
      %p129 = por %p127, %p128
      %p130 = scmp.ne.s32.totalorder %s116, %s117
      %p131 = scmp.eq.s32.totalorder %s31, 2
      %p132 = por %p130, %p131
      %p134 = scmp.ne.s32.totalorder %s117, %s133
      %p135 = scmp.eq.s32.totalorder %s31, 0
      %p136 = por %p134, %p135
      %s137 = ssub.s32 %s25, %s32
      %p138 = scmp.eq.s32.totalorder %s137, 0
      %s140 = sadd.s32 %s139, 1
      %s141 = scalar_select %p138, %s139, %s140
      %p144 = pneg %p138
      %p145 = scmp.eq.s32.totalorder %s25, 2
      %p146 = por %p144, %p145
      %p147 = scmp.ne.s32.totalorder %s139, %s142
      %p148 = scmp.eq.s32.totalorder %s25, 0
      %p149 = por %p147, %p148
      %p150 = scmp.ne.s32.totalorder %s139, %s142
      %p151 = scmp.eq.s32.totalorder %s30, 2
      %p152 = por %p150, %p151
      %p153 = scmp.ne.s32.totalorder %s142, %s143
      %p154 = scmp.eq.s32.totalorder %s30, 0
      %p155 = por %p153, %p154
      %p156 = scmp.ne.s32.totalorder %s142, %s143
      %p157 = scmp.eq.s32.totalorder %s31, 2
      %p158 = por %p156, %p157
      %p160 = scmp.ne.s32.totalorder %s143, %s159
      %p161 = scmp.eq.s32.totalorder %s31, 0
      %p162 = por %p160, %p161
      %s163 = ssub.s32 %s25, %s32
      %p164 = scmp.eq.s32.totalorder %s163, 0
      %s166 = sadd.s32 %s165, 1
      %s167 = scalar_select %p164, %s165, %s166
      %p170 = pneg %p164
      %p171 = scmp.eq.s32.totalorder %s25, 2
      %p172 = por %p170, %p171
      %p173 = scmp.ne.s32.totalorder %s165, %s168
      %p174 = scmp.eq.s32.totalorder %s25, 0
      %p175 = por %p173, %p174
      %p176 = scmp.ne.s32.totalorder %s165, %s168
      %p177 = scmp.eq.s32.totalorder %s30, 2
      %p178 = por %p176, %p177
      %p179 = scmp.ne.s32.totalorder %s168, %s169
      %p180 = scmp.eq.s32.totalorder %s30, 0
      %p181 = por %p179, %p180
      %p182 = scmp.ne.s32.totalorder %s168, %s169
      %p183 = scmp.eq.s32.totalorder %s31, 2
      %p184 = por %p182, %p183
      %p186 = scmp.ne.s32.totalorder %s169, %s185
      %p187 = scmp.eq.s32.totalorder %s31, 0
      %p188 = por %p186, %p187
      %p189 = scmp.le.s32.totalorder 1, %s25
      %p190 = scmp.lt.s32.totalorder %s25, 4
      %p191 = pnand %p189, %p190
      %p192 = pneg %p191
      // Predicated region
      $region9: #{tpu_custom_call.1} parent=5 // pred_check
        _
      $region10: #{tpu_custom_call.1} parent=5 // pred_check_branch
        %194 = sbr.rel (%p191) target = $region12
      $region11: #{tpu_custom_call.1} parent=5 // pred_region
        %s195 = ssub.s32 %s25, 1
      $region12: #{tpu_custom_call.1} parent=5 // pred_fallthru
        _
      %p196 = scmp.lt.s32.totalorder %s25, 3
      // Predicated region
      $region13: #{tpu_custom_call.1} parent=5 // pred_check
        %p197 = pneg %p196
      $region14: #{tpu_custom_call.1} parent=5 // pred_check_branch
        %199 = sbr.rel (%p197) target = $region16
      $region15: #{tpu_custom_call.1} parent=5 // pred_region
        // Predicated region
        $region17: #{tpu_custom_call.1} parent=15 // pred_check
          %p200 = pneg %p45
        $region18: #{tpu_custom_call.1} parent=15 // pred_check_branch
          %202 = sbr.rel (%p200) target = $region20
        $region19: #{tpu_custom_call.1} parent=15 // pred_region
          %p203 = scmp.lt.s32.totalorder %s25, 2
          %s204 = scalar_select %p203, %s25, 2
          %s205 = smul.addr %s204, 4
          %s206 = smul.addr %s205, 8
          %s207 = scalar_lea.vmem %s1, %s206
        $region20: #{tpu_custom_call.1} parent=15 // pred_fallthru
          _
        // Predicated region
        $region21: #{tpu_custom_call.1} parent=15 // pred_check
          %p208 = pneg %p71
        $region22: #{tpu_custom_call.1} parent=15 // pred_check_branch
          %210 = sbr.rel (%p208) target = $region24
        $region23: #{tpu_custom_call.1} parent=15 // pred_region
          %p211 = scmp.lt.s32.totalorder %s25, 2
          %s212 = scalar_select %p211, %s25, 2
          %s213 = smul.addr %s212, 8
          %s214 = scalar_lea.vmem %s2, %s213
        $region24: #{tpu_custom_call.1} parent=15 // pred_fallthru
          _
        // Predicated region
        $region25: #{tpu_custom_call.1} parent=15 // pred_check
          %p215 = pneg %p97
        $region26: #{tpu_custom_call.1} parent=15 // pred_check_branch
          %217 = sbr.rel (%p215) target = $region28
        $region27: #{tpu_custom_call.1} parent=15 // pred_region
          %p218 = scmp.lt.s32.totalorder %s25, 2
          %s219 = scalar_select %p218, %s25, 2
          %s220 = smul.addr %s219, 4
          %s221 = smul.addr %s220, 8
          %s222 = scalar_lea.vmem %s3, %s221
        $region28: #{tpu_custom_call.1} parent=15 // pred_fallthru
          _
        // Predicated region
        $region29: #{tpu_custom_call.1} parent=15 // pred_check
          %p223 = pneg %p123
        $region30: #{tpu_custom_call.1} parent=15 // pred_check_branch
          %225 = sbr.rel (%p223) target = $region32
        $region31: #{tpu_custom_call.1} parent=15 // pred_region
          %p226 = scmp.lt.s32.totalorder %s25, 2
          %s227 = scalar_select %p226, %s25, 2
          %s228 = scalar_lea.vmem %s4, %s227
        $region32: #{tpu_custom_call.1} parent=15 // pred_fallthru
          _
      $region16: #{tpu_custom_call.1} parent=5 // pred_fallthru
        _
      %p229 = scmp.le.s32.totalorder 1, %s25
      %p230 = scmp.lt.s32.totalorder %s25, 4
      %p231 = pnand %p229, %p230
      %p232 = pneg %p231
      // Predicated region
      $region33: #{tpu_custom_call.1} parent=5 // pred_check
        _
      $region34: #{tpu_custom_call.1} parent=5 // pred_check_branch
        %234 = sbr.rel (%p231) target = $region36
      $region35: #{tpu_custom_call.1} parent=5 // pred_region
        %s235 = ssub.s32 %s25, 1
        %p236 = scmp.lt.s32.totalorder %s30, 2
        %s237 = scalar_select %p236, %s30, 2
        %s238 = smul.addr %s237, 4
        %s239 = smul.addr %s238, 8
        %s240 = scalar_lea.vmem %s1, %s239
        %p241 = pneg %p51
        %p242 = pneg %p48
        %p243 = scmp.lt.s32.totalorder %s30, 2
        %s244 = scalar_select %p243, %s30, 2
        %s245 = smul.addr %s244, 8
        %s246 = scalar_lea.vmem %s2, %s245
        %p247 = pneg %p77
        %p248 = pneg %p74
        %p249 = scmp.lt.s32.totalorder %s30, 2
        %s250 = scalar_select %p249, %s30, 2
        %s251 = smul.addr %s250, 4
        %s252 = smul.addr %s251, 8
        %s253 = scalar_lea.vmem %s3, %s252
        %p254 = pneg %p103
        %p255 = pneg %p100
        %p256 = scmp.lt.s32.totalorder %s30, 2
        %s257 = scalar_select %p256, %s30, 2
        %s258 = scalar_lea.vmem %s4, %s257
        %p259 = pneg %p129
        %p260 = pneg %p126
        %p261 = pneg %p155
        %p262 = pneg %p152
        %s263 = sand.u32 %s142, 1
        %s264 = scalar_lea.sflag [#allocation6], %s263
        %s265 = sand.u32 %s142, 1
        %s266 = smul.addr %s265, 2
        %s267 = scalar_lea.vmem [#allocation5], %s266
        %p268 = pneg %p181
        %p269 = pneg %p178
        %s270 = sand.u32 %s168, 1
        %s271 = scalar_lea.sflag [#allocation8], %s270
        %s272 = sand.u32 %s168, 1
        %s273 = smul.addr %s272, 2
        %s274 = scalar_lea.vmem [#allocation7], %s273
        %p275 = scmp.lt.s32.totalorder %s30, 2
        %s276 = scalar_select %p275, %s30, 2
        %s277 = smul.addr %s276, 4
        %s278 = smul.addr %s277, 8
        %s279 = scalar_lea.vmem %s1, %s278
        %p280 = scmp.lt.s32.totalorder %s30, 2
        %s281 = scalar_select %p280, %s30, 2
        %s282 = smul.addr %s281, 8
        %s283 = scalar_lea.vmem %s2, %s282
        %p284 = scmp.lt.s32.totalorder %s30, 2
        %s285 = scalar_select %p284, %s30, 2
        %s286 = smul.addr %s285, 4
        %s287 = smul.addr %s286, 8
        %s288 = scalar_lea.vmem %s3, %s287
        %p289 = scmp.lt.s32.totalorder %s30, 2
        %s290 = scalar_select %p289, %s30, 2
        %s291 = scalar_lea.vmem %s4, %s290
        %s292 = sld [smem:[#allocation4 + %s30]]
        %v293 = vld [vmem:[%s279] sm:$0xff]
        %v294 = vld [vmem:[%s279 + $0x8] sm:$0xff]
        %v295 = vld [vmem:[%s279 + $0x10] sm:$0xff]
        %v296 = vld [vmem:[%s279 + $0x18] sm:$0xff]
        %v297 = vld [vmem:[%s283] sm:$0xff]
        %v298 = vld [vmem:[%s291] sm:$0x1]
        %v300 = vlaneseq
        %v301 = vshrl.u32 %v300, 7
        %v302 = vsub.s32 0, %v301
        %v303 = vrot.slane %v298, %v302
        %vm305 = vcmask 64512
        %v307 = vsel %vm305, %v293, 0
        %v310 = vsel %vm305, %v294, 0
        %v313 = vsel %vm305, %v295, 0
        %v316 = vsel %vm305, %v296, 0
        %318 = vmatprep.subr.mxu0 0.0
        %319 = vmatpush1.msra.mxu0 0.0
        %320 = vmatprep.subr.mxu0 0.0
        %321 = vmatpush1.msra.mxu0 0.0
        %322 = vmatprep.subr.mxu0 0.0
        %323 = vmatpush1.msra.mxu0 0.0
        %324 = vmatprep.subr.mxu0 0.0
        %325 = vmatpush1.msra.mxu0 0.0
        %326 = vmatprep.subr.mxu0 0.0
        %327 = vmatpush1.msra.mxu0 0.0
        %328 = vmatprep.subr.mxu0 0.0
        %329 = vmatpush1.msra.mxu0 0.0
        %330 = vmatprep.subr.mxu0 0.0
        %331 = vmatpush1.msra.mxu0 0.0
        %332 = vmatprep.subr.mxu0 0.0
        %333 = vmatpush1.msra.mxu0 0.0
        %334 = vmatprep.subr.mxu0 0.0
        %335 = vmatpush1.msra.mxu0 0.0
        %336 = vmatprep.subr.mxu0 0.0
        %337 = vmatpush1.msra.mxu0 0.0
        %338 = vmatprep.subr.mxu0 0.0
        %339 = vmatpush1.msra.mxu0 0.0
        %340 = vmatprep.subr.mxu0 0.0
        %341 = vmatpush1.msra.mxu0 0.0
        %342 = vmatprep.subr.mxu0 0.0
        %343 = vmatpush1.msra.mxu0 0.0
        %344 = vmatprep.subr.mxu0 0.0
        %345 = vmatpush1.msra.mxu0 0.0
        %346 = vmatprep.subr.mxu0 0.0
        %347 = vmatpush1.msra.mxu0 0.0
        %348 = vmatprep.subr.mxu0 0.0
        %349 = vmatpush1.msra.mxu0 %v297
        %350 = vmatprep.subr.mxu0 0.0
        %351 = vmatpush2.msra.mxu0 0.0
        %352 = vmatprep.subr.mxu0 0.0
        %353 = vmatpush2.msra.mxu0 0.0
        %354 = vmatprep.subr.mxu0 0.0
        %355 = vmatpush2.msra.mxu0 0.0
        %356 = vmatprep.subr.mxu0 0.0
        %357 = vmatpush2.msra.mxu0 0.0
        %358 = vmatprep.subr.mxu0 0.0
        %359 = vmatpush2.msra.mxu0 0.0
        %360 = vmatprep.subr.mxu0 0.0
        %361 = vmatpush2.msra.mxu0 0.0
        %362 = vmatprep.subr.mxu0 0.0
        %363 = vmatpush2.msra.mxu0 0.0
        %364 = vmatprep.subr.mxu0 0.0
        %365 = vmatpush2.msra.mxu0 0.0
        %366 = vmatprep.subr.mxu0 0.0
        %367 = vmatpush2.msra.mxu0 0.0
        %368 = vmatprep.subr.mxu0 0.0
        %369 = vmatpush2.msra.mxu0 0.0
        %370 = vmatprep.subr.mxu0 0.0
        %371 = vmatpush2.msra.mxu0 0.0
        %372 = vmatprep.subr.mxu0 0.0
        %373 = vmatpush2.msra.mxu0 0.0
        %374 = vmatprep.subr.mxu0 0.0
        %375 = vmatpush2.msra.mxu0 0.0
        %376 = vmatprep.subr.mxu0 0.0
        %377 = vmatpush2.msra.mxu0 0.0
        %378 = vmatprep.subr.mxu0 0.0
        %379 = vmatpush2.msra.mxu0 0.0
        %380 = vmatprep.subr.mxu0 0.0
        %381 = vmatpush2.msra.mxu0 0.0
        %382 = vmatprep.mubr.f32.mxu0 0.0
        %383 = vmatmul.mubr.f32.gmra.mxu0 %v307
        %v384 = vpop.f32.mrf.mxu0
        %v385 = vadd.f32 %v303, %v384
        %v386 = vpop.f32.mrf.mxu0
        %387 = vmatprep.mubr.f32.mxu0 0.0
        %388 = vmatmul.mubr.f32.gmra.mxu0 %v310
        %v389 = vpop.f32.mrf.mxu0
        %v390 = vadd.f32 %v303, %v389
        %v391 = vpop.f32.mrf.mxu0
        %392 = vmatprep.mubr.f32.mxu0 0.0
        %393 = vmatmul.mubr.f32.gmra.mxu0 %v313
        %v394 = vpop.f32.mrf.mxu0
        %v395 = vadd.f32 %v303, %v394
        %v396 = vpop.f32.mrf.mxu0
        %397 = vmatprep.mubr.f32.mxu0 0.0
        %398 = vmatmul.mubr.f32.gmra.mxu0 %v316
        %v399 = vpop.f32.mrf.mxu0
        %v400 = vadd.f32 %v303, %v399
        %v401 = vpop.f32.mrf.mxu0
        %402 = vdwg.mxu0
        %403 = vst [vmem:[#allocation2] sm:$0xff] %v385
        %404 = vst [vmem:[#allocation2 + $0x8] sm:$0xff] %v390
        %405 = vst [vmem:[#allocation2 + $0x10] sm:$0xff] %v395
        %406 = vst [vmem:[#allocation2 + $0x18] sm:$0xff] %v400
        %v407 = vld [vmem:[%s288] sm:$0xff]
        %v408 = vld [vmem:[%s288 + $0x8] sm:$0xff]
        %v409 = vld [vmem:[%s288 + $0x10] sm:$0xff]
        %v410 = vld [vmem:[%s288 + $0x18] sm:$0xff]
        // While loop
        $region37: #{tpu_custom_call.1} parent=35 // loop_pre_header
          _
        $region38: #{tpu_custom_call.1} parent=35 // loop_header
          %s412 = sphi 0, %s414
          %p413 = scmp.ge.s32.totalorder %s412, %s292
          %v417 = vphi 0.0, %v522
          %v418 = vphi 0.0, %v516
        $region39: #{tpu_custom_call.1} parent=35 // loop_header_branch
          %416 = sbr.rel (%p413) target = $region43
        $region40: #{tpu_custom_call.1} parent=35 // loop_body
          %s419 = smul.u32 %s412, 2
          %s420 = scalar_lea.vmem [#allocation2], %s419
          %v421 = vld [vmem:[%s420] sm:$0x3]
          %423 = vrot.lane.b32.xlu0 %v417, 32
          %v424 = vpop.permute.xlu0 %423
          %vm425 = vcmask 261120
          %v426 = vsel %vm425, %v424, 0
          %428 = vmatprep.subr.mxu0 0.0
          %429 = vmatpush1.msra.mxu0 0.0
          %430 = vmatprep.subr.mxu0 0.0
          %431 = vmatpush1.msra.mxu0 0.0
          %432 = vmatprep.subr.mxu0 0.0
          %433 = vmatpush1.msra.mxu0 0.0
          %434 = vmatprep.subr.mxu0 0.0
          %435 = vmatpush1.msra.mxu0 0.0
          %436 = vmatprep.subr.mxu0 0.0
          %437 = vmatpush1.msra.mxu0 0.0
          %438 = vmatprep.subr.mxu0 0.0
          %439 = vmatpush1.msra.mxu0 0.0
          %440 = vmatprep.subr.mxu0 0.0
          %441 = vmatpush1.msra.mxu0 0.0
          %442 = vmatprep.subr.mxu0 0.0
          %443 = vmatpush1.msra.mxu0 0.0
          %444 = vmatprep.subr.mxu0 0.0
          %445 = vmatpush1.msra.mxu0 0.0
          %446 = vmatprep.subr.mxu0 0.0
          %447 = vmatpush1.msra.mxu0 0.0
          %448 = vmatprep.subr.mxu0 0.0
          %449 = vmatpush1.msra.mxu0 0.0
          %450 = vmatprep.subr.mxu0 0.0
          %451 = vmatpush1.msra.mxu0 0.0
          %452 = vmatprep.subr.mxu0 0.0
          %453 = vmatpush1.msra.mxu0 %v410
          %454 = vmatprep.subr.mxu0 0.0
          %455 = vmatpush1.msra.mxu0 %v409
          %456 = vmatprep.subr.mxu0 0.0
          %457 = vmatpush1.msra.mxu0 %v408
          %458 = vmatprep.subr.mxu0 0.0
          %459 = vmatpush1.msra.mxu0 %v407
          %460 = vmatprep.subr.mxu0 0.0
          %461 = vmatpush2.msra.mxu0 0.0
          %462 = vmatprep.subr.mxu0 0.0
          %463 = vmatpush2.msra.mxu0 0.0
          %464 = vmatprep.subr.mxu0 0.0
          %465 = vmatpush2.msra.mxu0 0.0
          %466 = vmatprep.subr.mxu0 0.0
          %467 = vmatpush2.msra.mxu0 0.0
          %468 = vmatprep.subr.mxu0 0.0
          %469 = vmatpush2.msra.mxu0 0.0
          %470 = vmatprep.subr.mxu0 0.0
          %471 = vmatpush2.msra.mxu0 0.0
          %472 = vmatprep.subr.mxu0 0.0
          %473 = vmatpush2.msra.mxu0 0.0
          %474 = vmatprep.subr.mxu0 0.0
          %475 = vmatpush2.msra.mxu0 0.0
          %476 = vmatprep.subr.mxu0 0.0
          %477 = vmatpush2.msra.mxu0 0.0
          %478 = vmatprep.subr.mxu0 0.0
          %479 = vmatpush2.msra.mxu0 0.0
          %480 = vmatprep.subr.mxu0 0.0
          %481 = vmatpush2.msra.mxu0 0.0
          %482 = vmatprep.subr.mxu0 0.0
          %483 = vmatpush2.msra.mxu0 0.0
          %484 = vmatprep.subr.mxu0 0.0
          %485 = vmatpush2.msra.mxu0 0.0
          %486 = vmatprep.subr.mxu0 0.0
          %487 = vmatpush2.msra.mxu0 0.0
          %488 = vmatprep.subr.mxu0 0.0
          %489 = vmatpush2.msra.mxu0 0.0
          %490 = vmatprep.subr.mxu0 0.0
          %491 = vmatpush2.msra.mxu0 0.0
          %492 = vmatprep.mubr.f32.mxu0 0.0
          %493 = vmatmul.mubr.f32.gmra.mxu0 %v426
          %v494 = vpop.f32.mrf.mxu0
          %v495 = vadd.f32 0.0, %v494
          %v496 = vpop.f32.mrf.mxu0
          %497 = vdwg.mxu0
          %v498 = vadd.f32 %v421, %v495
          %v499 = vxor.u32 %v498, 2147483648
          %v500 = vmul.f32 %v499, 1.442695
          %v501 = vpow.pop %v500
          %v502 = vadd.f32 %v501, 1.0
          %v503 = vrcp.pop %v502
          %v504 = vmul.f32 1.0, %v503
          %v505 = vtanh.pop %v498
          %v506 = vmul.f32 %v504, %v418
          %508 = vrot.lane.b32.xlu0 %v505, 64
          %v509 = vpop.permute.xlu0 %508
          %v511 = vmul.f32 %v504, %v509
          %513 = vrot.lane.b32.xlu0 %v511, 32
          %v514 = vpop.permute.xlu0 %513
          %v516 = vadd.f32 %v506, %v514
          %v517 = vtanh.pop %v516
          %519 = vrot.lane.b32.xlu0 %v517, 64
          %v520 = vpop.permute.xlu0 %519
          %v522 = vmul.f32 %v504, %v520
        $region41: #{tpu_custom_call.1} parent=35 // loop_footer
          %s414 = sadd.s32 %s412, 1
        $region42: #{tpu_custom_call.1} parent=35 // loop_footer_branch
          %411 = sbr.rel target = $region38
        $region43: #{tpu_custom_call.1} parent=35 // loop_exit
          _
        %524 = vrot.lane.b32.xlu0 %v417, 32
        %v525 = vpop.permute.xlu0 %524
        %vm527 = vcmask 254976
        %528 = vst.msk [vmem:[%s267] sm:$0x3] %vm527, %v525
        %530 = vrot.lane.b32.xlu0 %v418, 96
        %v531 = vpop.permute.xlu0 %530
        %533 = vst.msk [vmem:[%s274] sm:$0x3] %vm527, %v531
        %s534 = sand.u32 %s142, 1
        %s535 = scalar_lea.sflag [#allocation6], %s534
        %s536 = sand.u32 %s142, 1
        %s537 = smul.addr %s536, 2
        %s538 = scalar_lea.vmem [#allocation5], %s537
        %s539 = sand.u32 %s168, 1
        %s540 = scalar_lea.sflag [#allocation8], %s539
        %s541 = sand.u32 %s168, 1
        %s542 = smul.addr %s541, 2
        %s543 = scalar_lea.vmem [#allocation7], %s542
        // Predicated region
        $region44: #{tpu_custom_call.1} parent=35 // pred_check
          %p544 = pneg %p152
        $region45: #{tpu_custom_call.1} parent=35 // pred_check_branch
          %546 = sbr.rel (%p544) target = $region47
        $region46: #{tpu_custom_call.1} parent=35 // pred_region
          %s548 = ssub.s32 32, 32
          %549 = vsyncadd %s535, %s548
          %s550 = smul.addr %s30, 32
          %s551 = scalar_lea.hbm %s5, %s550
          %s553 = sshll.u32 %s538, 4
          %s554 = int_to_ptr.vmem [resolvable:$true] %s553
          %556 = dma.vmem_to_hbm [thread:$0]  %s554, 32, %s551, %s535
        $region47: #{tpu_custom_call.1} parent=35 // pred_fallthru
          _
        // Predicated region
        $region48: #{tpu_custom_call.1} parent=35 // pred_check
          %p557 = pneg %p178
        $region49: #{tpu_custom_call.1} parent=35 // pred_check_branch
          %559 = sbr.rel (%p557) target = $region51
        $region50: #{tpu_custom_call.1} parent=35 // pred_region
          %s561 = ssub.s32 32, 32
          %562 = vsyncadd %s540, %s561
          %s563 = smul.addr %s30, 32
          %s564 = scalar_lea.hbm %s6, %s563
          %s566 = sshll.u32 %s543, 4
          %s567 = int_to_ptr.vmem [resolvable:$true] %s566
          %569 = dma.vmem_to_hbm [thread:$0]  %s567, 32, %s564, %s540
        $region51: #{tpu_custom_call.1} parent=35 // pred_fallthru
          _
      $region36: #{tpu_custom_call.1} parent=5 // pred_fallthru
        _
      %p570 = scmp.le.s32.totalorder 2, %s25
      // Predicated region
      $region52: #{tpu_custom_call.1} parent=5 // pred_check
        %p571 = pneg %p570
      $region53: #{tpu_custom_call.1} parent=5 // pred_check_branch
        %573 = sbr.rel (%p571) target = $region55
      $region54: #{tpu_custom_call.1} parent=5 // pred_region
        %s574 = ssub.s32 %s25, 2
        // Predicated region
        $region56: #{tpu_custom_call.1} parent=54 // pred_check
          %p575 = pneg %p158
        $region57: #{tpu_custom_call.1} parent=54 // pred_check_branch
          %577 = sbr.rel (%p575) target = $region59
        $region58: #{tpu_custom_call.1} parent=54 // pred_region
          %s578 = sand.u32 %s143, 1
          %s579 = scalar_lea.sflag [#allocation6], %s578
          %s580 = sand.u32 %s143, 1
          %s581 = smul.addr %s580, 2
          %s582 = scalar_lea.vmem [#allocation5], %s581
          %583 = dma.done %s579, 32
        $region59: #{tpu_custom_call.1} parent=54 // pred_fallthru
          _
        // Predicated region
        $region60: #{tpu_custom_call.1} parent=54 // pred_check
          %p584 = pneg %p184
        $region61: #{tpu_custom_call.1} parent=54 // pred_check_branch
          %586 = sbr.rel (%p584) target = $region63
        $region62: #{tpu_custom_call.1} parent=54 // pred_region
          %s587 = sand.u32 %s169, 1
          %s588 = scalar_lea.sflag [#allocation8], %s587
          %s589 = sand.u32 %s169, 1
          %s590 = smul.addr %s589, 2
          %s591 = scalar_lea.vmem [#allocation7], %s590
          %592 = dma.done %s588, 32
        $region63: #{tpu_custom_call.1} parent=54 // pred_fallthru
          _
      $region55: #{tpu_custom_call.1} parent=5 // pred_fallthru
        _
    $region6: #{tpu_custom_call.1} parent=1 // loop_footer
      %s29 = sadd.s32 1, %s25
    $region7: #{tpu_custom_call.1} parent=1 // loop_footer_branch
      %24 = sbr.rel target = $region3
    $region8: #{tpu_custom_call.1} parent=1 // loop_exit
      _
    %593 = vsyncpa [#allocation6], 1
    %s594 = scalar_lea.sflag [#allocation6], 1
    %595 = vsyncpa %s594, 1
    %596 = vsyncpa [#allocation8], 1
    %s597 = scalar_lea.sflag [#allocation8], 1
    %598 = vsyncpa %s597, 1

</llo_original>
